<compile_context>
chip_gen: v7x
topology: tpu7x:2x2x1
jax: 0.10.0
libtpu: 0.0.40
codegen_flags: <defaults>
</compile_context>

<pallas_src>
import functools

import jax
import jax.numpy as jnp
from jax.experimental import pallas as pl
from jax.experimental.pallas import tpu as pltpu

LANE = 128  # TPU lane width; hidden/class dims are padded to this.
VMEM_LIMIT = 32 * 1024 * 1024  # well above tile needs, valid on v5e/v6e/v7x


def _round_up(x, m):
    return (x + m - 1) // m * m


# ---------------------------------------------------------------------------
# Kernel 1: dense projection  s = x @ W   (computed once per layer)
# ---------------------------------------------------------------------------
def project_kernel(x_ref, w_ref, out_ref):
    out_ref[...] = jnp.dot(
        x_ref[...], w_ref[...], preferred_element_type=jnp.float32
    ).astype(out_ref.dtype)


def project(x, w, *, tm, out_dtype):
    n, f = x.shape
    _, h = w.shape
    return pl.pallas_call(
        project_kernel,
        out_shape=jax.ShapeDtypeStruct((n, h), out_dtype),
        grid=(n // tm,),
        in_specs=[
            pl.BlockSpec((tm, f), lambda i: (i, 0)),
            pl.BlockSpec((f, h), lambda i: (0, 0)),
        ],
        out_specs=pl.BlockSpec((tm, h), lambda i: (i, 0)),
        compiler_params=pltpu.CompilerParams(
            dimension_semantics=("parallel",),
            vmem_limit_bytes=VMEM_LIMIT,
        ),
    )(x, w)


# ---------------------------------------------------------------------------
# Kernel 2: aggregation  out = act(adj @ s + b), streamed over (row, K) tiles
# ---------------------------------------------------------------------------
def aggregate_kernel(adj_ref, s_ref, b_ref, out_ref, acc_ref, *, activation, n_valid):
    k = pl.program_id(1)

    @pl.when(k == 0)
    def _():
        acc_ref[...] = jnp.zeros_like(acc_ref)

    acc_ref[...] += jnp.dot(
        adj_ref[...], s_ref[...], preferred_element_type=jnp.float32
    )

    @pl.when(k == pl.num_programs(1) - 1)
    def _():
        z = acc_ref[...] + b_ref[...]  # f32 elementwise epilogue
        if activation == "relu":
            out_ref[...] = jnp.maximum(z, 0.0).astype(out_ref.dtype)
        else:
            # log_softmax over the first n_valid (real) class columns only;
            # padded lane columns are masked out of the normalizer.
            col = jax.lax.broadcasted_iota(jnp.int32, z.shape, 1)
            z = jnp.where(col < n_valid, z, -1e30)
            m = jnp.max(z, axis=1, keepdims=True)
            zz = z - m
            lse = jnp.log(jnp.sum(jnp.exp(zz), axis=1, keepdims=True))
            out_ref[...] = (zz - lse).astype(out_ref.dtype)


def aggregate(adj, s, b, *, tm, tk, activation, n_valid, out_dtype):
    n = adj.shape[0]
    h = s.shape[1]
    kern = functools.partial(aggregate_kernel, activation=activation, n_valid=n_valid)
    return pl.pallas_call(
        kern,
        out_shape=jax.ShapeDtypeStruct((n, h), out_dtype),
        grid=(n // tm, n // tk),  # reduction axis (K over adj columns) last
        in_specs=[
            pl.BlockSpec((tm, tk), lambda i, k: (i, k)),
            pl.BlockSpec((tk, h), lambda i, k: (k, 0)),
            pl.BlockSpec((1, h), lambda i, k: (0, 0)),
        ],
        out_specs=pl.BlockSpec((tm, h), lambda i, k: (i, 0)),
        scratch_shapes=[pltpu.VMEM((tm, h), jnp.float32)],
        compiler_params=pltpu.CompilerParams(
            dimension_semantics=("parallel", "arbitrary"),
            vmem_limit_bytes=VMEM_LIMIT,
        ),
    )(adj, s, b)


# ---------------------------------------------------------------------------
# Full GCN forward
# ---------------------------------------------------------------------------
def gcn_forward(x, adj, w1, b1, w2, b2, *, tm=128, tk=128):
    """GCN inference forward. Dropout omitted (identity at inference)."""
    n, nfeat = x.shape
    nhid = w1.shape[1]
    nclass = w2.shape[1]

    np_ = _round_up(n, max(tm, tk))
    hpad = _round_up(nhid, LANE)
    cpad = _round_up(nclass, LANE)

    f32, bf16 = jnp.float32, jnp.bfloat16

    # Zero-pad nodes and lane-pad hidden/class dims; cast matmul operands to bf16.
    xp = jnp.zeros((np_, nfeat), bf16).at[:n].set(x.astype(bf16))
    adjp = jnp.zeros((np_, np_), bf16).at[:n, :n].set(adj.astype(bf16))
    w1p = jnp.zeros((nfeat, hpad), bf16).at[:, :nhid].set(w1.astype(bf16))
    b1p = jnp.zeros((1, hpad), f32).at[0, :nhid].set(b1.astype(f32))
    w2p = jnp.zeros((hpad, cpad), bf16).at[:nhid, :nclass].set(w2.astype(bf16))
    b2p = jnp.zeros((1, cpad), f32).at[0, :nclass].set(b2.astype(f32))

    # Layer 1: project once, then stream adj row/K tiles + relu.
    s1 = project(xp, w1p, tm=tm, out_dtype=bf16)  # (np_, hpad) bf16
    h = aggregate(adjp, s1, b1p, tm=tm, tk=tk,
                  activation="relu", n_valid=nhid, out_dtype=bf16)

    # Layer 2: project once, then stream adj row/K tiles + masked log_softmax.
    s2 = project(h, w2p, tm=tm, out_dtype=bf16)  # (np_, cpad) bf16
    out = aggregate(adjp, s2, b2p, tm=tm, tk=tk,
                    activation="log_softmax", n_valid=nclass, out_dtype=f32)

    return out[:n, :nclass]


def init_gc_params(key, in_features, out_features):
    """Matches pygcn GraphConvolution.reset_parameters: U(-stdv, stdv), stdv=1/sqrt(out)."""
    kw, kb = jax.random.split(key)
    stdv = 1.0 / jnp.sqrt(jnp.float32(out_features))
    w = jax.random.uniform(kw, (in_features, out_features), jnp.float32, -stdv, stdv)
    b = jax.random.uniform(kb, (out_features,), jnp.float32, -stdv, stdv)
    return w, b


if __name__ == "__main__":
    # Small synthetic problem: 128 nodes, 64 input feats, 32 hidden, 8 classes.
    N, NFEAT, NHID, NCLASS = 128, 64, 32, 8

    key = jax.random.PRNGKey(0)
    kx, kadj, k1, k2 = jax.random.split(key, 4)

    x = jax.random.normal(kx, (N, NFEAT), jnp.float32)

    # Symmetric-ish row-normalized adjacency with self loops (dense).
    a = (jax.random.uniform(kadj, (N, N)) < 0.05).astype(jnp.float32)
    a = jnp.maximum(a, a.T) + jnp.eye(N, dtype=jnp.float32)
    adj = a / jnp.sum(a, axis=1, keepdims=True)

    w1, b1 = init_gc_params(k1, NFEAT, NHID)
    w2, b2 = init_gc_params(k2, NHID, NCLASS)

    out = jax.block_until_ready(gcn_forward(x, adj, w1, b1, w2, b2))

    # Reference mirroring the kernel's bf16-operand / f32-accumulate casts.
    bf16 = jnp.bfloat16
    s1 = jnp.dot(x.astype(bf16), w1.astype(bf16), preferred_element_type=jnp.float32)
    h = jnp.maximum(
        jnp.dot(adj.astype(bf16), s1.astype(bf16), preferred_element_type=jnp.float32) + b1,
        0.0,
    )
    s2 = jnp.dot(h.astype(bf16), w2.astype(bf16), preferred_element_type=jnp.float32)
    logits = jnp.dot(adj.astype(bf16), s2.astype(bf16), preferred_element_type=jnp.float32) + b2
    ref = jax.nn.log_softmax(logits, axis=1)

    assert out.shape == (N, NCLASS)
    err = float(jnp.max(jnp.abs(out - ref)))
    assert err < 2e-2, f"max abs err vs bf16 reference: {err}"

    # Sanity vs full-f32 math (looser tolerance due to bf16 operands).
    ref32 = jax.nn.log_softmax(
        adj @ (jnp.maximum(adj @ (x @ w1) + b1, 0.0) @ w2) + b2, axis=1
    )
    assert float(jnp.max(jnp.abs(out - ref32))) < 5e-2

    print("KERNEL_OK")
</pallas_src>

<mosaic_0001>
module attributes {stable_mosaic.version = 11 : i64} {
  func.func @project_kernel(%arg0: i32, %arg1: memref<128x64xbf16, #tpu.memory_space<vmem>>, %arg2: memref<64x128xbf16, #tpu.memory_space<vmem>>, %arg3: memref<128x128xbf16, #tpu.memory_space<vmem>>) attributes {dimension_semantics = [#tpu.dimension_semantics<parallel>], iteration_bounds = array<i64: 1>, scalar_prefetch = 0 : i64, scratch_operands = 0 : i64, tpu.core_type = #tpu.core_type<tc>, window_params = [{transform_indices = @transform_0, window_bounds = array<i64: 128, 64>}, {pipeline_mode = #tpu.pipeline_mode<synchronous>, transform_indices = @transform_1, window_bounds = array<i64: 64, 128>}, {transform_indices = @transform_2, window_bounds = array<i64: 128, 128>}]} {
    %c0 = arith.constant 0 : index
    %c0_0 = arith.constant 0 : index
    %0 = vector.load %arg1[%c0, %c0_0] : memref<128x64xbf16, #tpu.memory_space<vmem>>, vector<128x64xbf16>
    %c0_1 = arith.constant 0 : index
    %c0_2 = arith.constant 0 : index
    %1 = vector.load %arg2[%c0_1, %c0_2] : memref<64x128xbf16, #tpu.memory_space<vmem>>, vector<64x128xbf16>
    %cst = arith.constant dense<0.000000e+00> : vector<128x128xf32>
    %2 = tpu.matmul %0, %1, %cst {dimension_numbers = #tpu.dot_dimension_numbers<[1], [0], [0], [1], [0, 0, 1, 1], [], []>} : vector<128x64xbf16>, vector<64x128xbf16>, vector<128x128xf32> -> vector<128x128xf32>
    %3 = arith.truncf %2 : vector<128x128xf32> to vector<128x128xbf16>
    %c0_3 = arith.constant 0 : index
    %c0_4 = arith.constant 0 : index
    %4 = vector.load %arg3[%c0_3, %c0_4] : memref<128x128xbf16, #tpu.memory_space<vmem>>, vector<128x128xbf16>
    tpu.vector_store %arg3[%c0_3, %c0_4], %3 {strides = array<i32>} : memref<128x128xbf16, #tpu.memory_space<vmem>>, vector<128x128xbf16>,
    return
  }
  func.func @transform_0(%arg0: i32) -> (i32, i32) {
    %c0_i32 = arith.constant 0 : i32
    %c0_i32_0 = arith.constant 0 : i32
    return %arg0, %c0_i32 : i32, i32
  }
  func.func @transform_1(%arg0: i32) -> (i32, i32) {
    %c0_i32 = arith.constant 0 : i32
    %c0_i32_0 = arith.constant 0 : i32
    %c0_i32_1 = arith.constant 0 : i32
    return %c0_i32, %c0_i32_0 : i32, i32
  }
  func.func @transform_2(%arg0: i32) -> (i32, i32) {
    %c0_i32 = arith.constant 0 : i32
    %c0_i32_0 = arith.constant 0 : i32
    return %arg0, %c0_i32 : i32, i32
  }
}

</mosaic_0001>

<llo_original>
// kernel: tpu_custom_call.1
$region0: #{tpu_custom_call.1}
  #allocation0 [shape = 'u32[]', space=smem, size = 0x4, offset = 0x4, fixed_abs, tag = 'smem constant byte address 0x4 - core index']
  #allocation1 [shape = 'u32[144,128]{1,0:T(1,128)}', space=vmem, size = 0x12000, scoped, tag = 'internal scratch']
  %s0 = inlined_call_operand.vmem [shape: bf16[128,64], index: 0, kind: input, shape index: {}]
  %s1 = inlined_call_operand.vmem [shape: bf16[64,128], index: 1, kind: input, shape index: {}]
  %s2 = inlined_call_operand.hbm [shape: bf16[128,128], index: 2, kind: output, shape index: {}]
  %s3 = sld [smem:[#allocation0]]
  $region18: #{tpu_custom_call.1} parent=0
    _
  %s5 = ssub.s32 1, %s3
  %s6 = scalar_select 0, %s5, %s3
  $region1: #{tpu_custom_call.1} parent=0
    #allocation2 [shape = 'u8[32768]{0}', space=vmem, size = 0x8000, scoped, tag = 'output window, operand 0, single buffered']
    #allocation3 [shape = 's32[1]{0}', space=sflag, size = 0x4, scoped, tag = 'scoped memory for tpu_custom_call.1']
    %7 = vsyncpa [#allocation3], 0
    // Predicated region
    $region2: #{tpu_custom_call.1} parent=1 // pred_check
      _
    $region3: #{tpu_custom_call.1} parent=1 // pred_check_branch
      %9 = sbr.rel (0) target = $region5
    $region4: #{tpu_custom_call.1} parent=1 // pred_region
      _
    $region5: #{tpu_custom_call.1} parent=1 // pred_fallthru
      _
    // Predicated region
    $region6: #{tpu_custom_call.1} parent=1 // pred_check
      _
    $region7: #{tpu_custom_call.1} parent=1 // pred_check_branch
      %11 = sbr.rel (0) target = $region9
    $region8: #{tpu_custom_call.1} parent=1 // pred_region
      _
    $region9: #{tpu_custom_call.1} parent=1 // pred_fallthru
      _
    %v13 = vld [vmem:[%s0] sm:$0xf]
    %v14 = vld [vmem:[%s0 + $0x4] sm:$0xf]
    %v15 = vld [vmem:[%s0 + $0x8] sm:$0xf]
    %v16 = vld [vmem:[%s0 + $0xc] sm:$0xf]
    %v17 = vld [vmem:[%s0 + $0x10] sm:$0xf]
    %v18 = vld [vmem:[%s0 + $0x14] sm:$0xf]
    %v19 = vld [vmem:[%s0 + $0x18] sm:$0xf]
    %v20 = vld [vmem:[%s0 + $0x1c] sm:$0xf]
    %v21 = vld [vmem:[%s0 + $0x20] sm:$0xf]
    %v22 = vld [vmem:[%s0 + $0x24] sm:$0xf]
    %v23 = vld [vmem:[%s0 + $0x28] sm:$0xf]
    %v24 = vld [vmem:[%s0 + $0x2c] sm:$0xf]
    %v25 = vld [vmem:[%s0 + $0x30] sm:$0xf]
    %v26 = vld [vmem:[%s0 + $0x34] sm:$0xf]
    %v27 = vld [vmem:[%s0 + $0x38] sm:$0xf]
    %v28 = vld [vmem:[%s0 + $0x3c] sm:$0xf]
    %v29 = vld [vmem:[%s1] sm:$0xf]
    %v30 = vld [vmem:[%s1 + $0x4] sm:$0xf]
    %v31 = vld [vmem:[%s1 + $0x8] sm:$0xf]
    %v32 = vld [vmem:[%s1 + $0xc] sm:$0xf]
    %v33 = vld [vmem:[%s1 + $0x10] sm:$0xf]
    %v34 = vld [vmem:[%s1 + $0x14] sm:$0xf]
    %v35 = vld [vmem:[%s1 + $0x18] sm:$0xf]
    %v36 = vld [vmem:[%s1 + $0x1c] sm:$0xf]
    %v53 = vunpack.c.l.b16 %v13
    %v54 = vunpack.c.l.b16 %v14
    %v55 = vunpack.c.l.b16 %v15
    %v56 = vunpack.c.l.b16 %v16
    %v57 = vunpack.c.l.b16 %v17
    %v58 = vunpack.c.l.b16 %v18
    %v59 = vunpack.c.l.b16 %v19
    %v60 = vunpack.c.l.b16 %v20
    %v61 = vunpack.c.l.b16 %v21
    %v62 = vunpack.c.l.b16 %v22
    %v63 = vunpack.c.l.b16 %v23
    %v64 = vunpack.c.l.b16 %v24
    %v65 = vunpack.c.l.b16 %v25
    %v66 = vunpack.c.l.b16 %v26
    %v67 = vunpack.c.l.b16 %v27
    %v68 = vunpack.c.l.b16 %v28
    %v69 = vpack.c.b16 %v54, %v53
    %v70 = vpack.c.b16 %v56, %v55
    %v71 = vpack.c.b16 %v58, %v57
    %v72 = vpack.c.b16 %v60, %v59
    %v73 = vpack.c.b16 %v62, %v61
    %v74 = vpack.c.b16 %v64, %v63
    %v75 = vpack.c.b16 %v66, %v65
    %v76 = vpack.c.b16 %v68, %v67
    %v85 = vunpack.c.l.b16 %v29
    %v86 = vunpack.c.l.b16 %v30
    %v87 = vunpack.c.l.b16 %v31
    %v88 = vunpack.c.l.b16 %v32
    %v89 = vunpack.c.l.b16 %v33
    %v90 = vunpack.c.l.b16 %v34
    %v91 = vunpack.c.l.b16 %v35
    %v92 = vunpack.c.l.b16 %v36
    %v93 = vpack.c.b16 %v86, %v85
    %v94 = vpack.c.b16 %v88, %v87
    %v95 = vpack.c.b16 %v90, %v89
    %v96 = vpack.c.b16 %v92, %v91
    %vm101 = vcmask 523264
    %v103 = vsel %vm101, %v69, 0
    %v106 = vsel %vm101, %v70, 0
    %v109 = vsel %vm101, %v71, 0
    %v112 = vsel %vm101, %v72, 0
    %v115 = vsel %vm101, %v73, 0
    %v118 = vsel %vm101, %v74, 0
    %v121 = vsel %vm101, %v75, 0
    %v124 = vsel %vm101, %v76, 0
    %126 = vmatprep.subr.bf16.mxu0 0
    %127 = vmatpush1.bf16.msra.mxu0 %v93
    %128 = vmatprep.subr.bf16.mxu0 0
    %129 = vmatpush1.bf16.msra.mxu0 %v94
    %130 = vmatprep.subr.bf16.mxu0 0
    %131 = vmatpush1.bf16.msra.mxu0 %v95
    %132 = vmatprep.subr.bf16.mxu0 0
    %133 = vmatpush1.bf16.msra.mxu0 %v96
    %134 = vmatprep.subr.bf16.mxu0 0
    %135 = vmatpush1.bf16.msra.mxu0 0
    %136 = vmatprep.subr.bf16.mxu0 0
    %137 = vmatpush1.bf16.msra.mxu0 0
    %138 = vmatprep.subr.bf16.mxu0 0
    %139 = vmatpush1.bf16.msra.mxu0 0
    %140 = vmatprep.subr.bf16.mxu0 0
    %141 = vmatpush1.bf16.msra.mxu0 0
    %142 = vmatprep.subr.bf16.mxu0 0
    %143 = vmatpush1.bf16.msra.mxu0 0
    %144 = vmatprep.subr.bf16.mxu0 0
    %145 = vmatpush1.bf16.msra.mxu0 0
    %146 = vmatprep.subr.bf16.mxu0 0
    %147 = vmatpush1.bf16.msra.mxu0 0
    %148 = vmatprep.subr.bf16.mxu0 0
    %149 = vmatpush1.bf16.msra.mxu0 0
    %150 = vmatprep.subr.bf16.mxu0 0
    %151 = vmatpush1.bf16.msra.mxu0 0
    %152 = vmatprep.subr.bf16.mxu0 0
    %153 = vmatpush1.bf16.msra.mxu0 0
    %154 = vmatprep.subr.bf16.mxu0 0
    %155 = vmatpush1.bf16.msra.mxu0 0
    %156 = vmatprep.subr.bf16.mxu0 0
    %157 = vmatpush1.bf16.msra.mxu0 0
    %158 = vmatprep.mubr.bf16.mxu0 0
    %159 = vmatmul.mubr.bf16.gmra.mrb[0].mxu0 %v103
    %v160 = vpop.f32.mrb[0].mxu0
    %v161 = vadd.f32 0.0, %v160
    %v162 = vpop.f32.mrb[0].mxu0
    %v163 = vpop.f32.mrb[0].mxu0
    %v164 = vadd.f32 0.0, %v163
    %v165 = vpop.f32.mrb[0].mxu0
    %166 = vmatprep.mubr.bf16.mxu0 0
    %167 = vmatmul.mubr.bf16.gmra.mrb[0].mxu0 %v106
    %v168 = vpop.f32.mrb[0].mxu0
    %v169 = vadd.f32 0.0, %v168
    %v170 = vpop.f32.mrb[0].mxu0
    %v171 = vpop.f32.mrb[0].mxu0
    %v172 = vadd.f32 0.0, %v171
    %v173 = vpop.f32.mrb[0].mxu0
    %174 = vmatprep.mubr.bf16.mxu0 0
    %175 = vmatmul.mubr.bf16.gmra.mrb[0].mxu0 %v109
    %v176 = vpop.f32.mrb[0].mxu0
    %v177 = vadd.f32 0.0, %v176
    %v178 = vpop.f32.mrb[0].mxu0
    %v179 = vpop.f32.mrb[0].mxu0
    %v180 = vadd.f32 0.0, %v179
    %v181 = vpop.f32.mrb[0].mxu0
    %182 = vmatprep.mubr.bf16.mxu0 0
    %183 = vmatmul.mubr.bf16.gmra.mrb[0].mxu0 %v112
    %v184 = vpop.f32.mrb[0].mxu0
    %v185 = vadd.f32 0.0, %v184
    %v186 = vpop.f32.mrb[0].mxu0
    %v187 = vpop.f32.mrb[0].mxu0
    %v188 = vadd.f32 0.0, %v187
    %v189 = vpop.f32.mrb[0].mxu0
    %190 = vmatprep.mubr.bf16.mxu0 0
    %191 = vmatmul.mubr.bf16.gmra.mrb[0].mxu0 %v115
    %v192 = vpop.f32.mrb[0].mxu0
    %v193 = vadd.f32 0.0, %v192
    %v194 = vpop.f32.mrb[0].mxu0
    %v195 = vpop.f32.mrb[0].mxu0
    %v196 = vadd.f32 0.0, %v195
    %v197 = vpop.f32.mrb[0].mxu0
    %198 = vmatprep.mubr.bf16.mxu0 0
    %199 = vmatmul.mubr.bf16.gmra.mrb[0].mxu0 %v118
    %v200 = vpop.f32.mrb[0].mxu0
    %v201 = vadd.f32 0.0, %v200
    %v202 = vpop.f32.mrb[0].mxu0
    %v203 = vpop.f32.mrb[0].mxu0
    %v204 = vadd.f32 0.0, %v203
    %v205 = vpop.f32.mrb[0].mxu0
    %206 = vmatprep.mubr.bf16.mxu0 0
    %207 = vmatmul.mubr.bf16.gmra.mrb[0].mxu0 %v121
    %v208 = vpop.f32.mrb[0].mxu0
    %v209 = vadd.f32 0.0, %v208
    %v210 = vpop.f32.mrb[0].mxu0
    %v211 = vpop.f32.mrb[0].mxu0
    %v212 = vadd.f32 0.0, %v211
    %v213 = vpop.f32.mrb[0].mxu0
    %214 = vmatprep.mubr.bf16.mxu0 0
    %215 = vmatmul.mubr.bf16.gmra.mrb[0].mxu0 %v124
    %v216 = vpop.f32.mrb[0].mxu0
    %v217 = vadd.f32 0.0, %v216
    %v218 = vpop.f32.mrb[0].mxu0
    %v219 = vpop.f32.mrb[0].mxu0
    %v220 = vadd.f32 0.0, %v219
    %v221 = vpop.f32.mrb[0].mxu0
    %222 = vdwg.mxu0
    %v223 = vpack.c.bf16 %v164, %v161
    %v224 = vpack.c.bf16 %v172, %v169
    %v225 = vpack.c.bf16 %v180, %v177
    %v226 = vpack.c.bf16 %v188, %v185
    %v227 = vpack.c.bf16 %v196, %v193
    %v228 = vpack.c.bf16 %v204, %v201
    %v229 = vpack.c.bf16 %v212, %v209
    %v230 = vpack.c.bf16 %v220, %v217
    %v239 = vunpack.c.l.b16 %v223
    %v240 = vunpack.c.h.b16 %v223
    %v241 = vunpack.c.l.b16 %v224
    %v242 = vunpack.c.h.b16 %v224
    %v243 = vunpack.c.l.b16 %v225
    %v244 = vunpack.c.h.b16 %v225
    %v245 = vunpack.c.l.b16 %v226
    %v246 = vunpack.c.h.b16 %v226
    %v247 = vunpack.c.l.b16 %v227
    %v248 = vunpack.c.h.b16 %v227
    %v249 = vunpack.c.l.b16 %v228
    %v250 = vunpack.c.h.b16 %v228
    %v251 = vunpack.c.l.b16 %v229
    %v252 = vunpack.c.h.b16 %v229
    %v253 = vunpack.c.l.b16 %v230
    %v254 = vunpack.c.h.b16 %v230
    %v255 = vpack.c.b16 %v239, %v239
    %v256 = vpack.c.b16 %v240, %v240
    %v257 = vpack.c.b16 %v241, %v241
    %v258 = vpack.c.b16 %v242, %v242
    %v259 = vpack.c.b16 %v243, %v243
    %v260 = vpack.c.b16 %v244, %v244
    %v261 = vpack.c.b16 %v245, %v245
    %v262 = vpack.c.b16 %v246, %v246
    %v263 = vpack.c.b16 %v247, %v247
    %v264 = vpack.c.b16 %v248, %v248
    %v265 = vpack.c.b16 %v249, %v249
    %v266 = vpack.c.b16 %v250, %v250
    %v267 = vpack.c.b16 %v251, %v251
    %v268 = vpack.c.b16 %v252, %v252
    %v269 = vpack.c.b16 %v253, %v253
    %v270 = vpack.c.b16 %v254, %v254
    %287 = vst [vmem:[#allocation2] sm:$0xf] %v255
    %288 = vst [vmem:[#allocation2 + $0x4] sm:$0xf] %v256
    %289 = vst [vmem:[#allocation2 + $0x8] sm:$0xf] %v257
    %290 = vst [vmem:[#allocation2 + $0xc] sm:$0xf] %v258
    %291 = vst [vmem:[#allocation2 + $0x10] sm:$0xf] %v259
    %292 = vst [vmem:[#allocation2 + $0x14] sm:$0xf] %v260
    %293 = vst [vmem:[#allocation2 + $0x18] sm:$0xf] %v261
    %294 = vst [vmem:[#allocation2 + $0x1c] sm:$0xf] %v262
    %295 = vst [vmem:[#allocation2 + $0x20] sm:$0xf] %v263
    %296 = vst [vmem:[#allocation2 + $0x24] sm:$0xf] %v264
    %297 = vst [vmem:[#allocation2 + $0x28] sm:$0xf] %v265
    %298 = vst [vmem:[#allocation2 + $0x2c] sm:$0xf] %v266
    %299 = vst [vmem:[#allocation2 + $0x30] sm:$0xf] %v267
    %300 = vst [vmem:[#allocation2 + $0x34] sm:$0xf] %v268
    %301 = vst [vmem:[#allocation2 + $0x38] sm:$0xf] %v269
    %302 = vst [vmem:[#allocation2 + $0x3c] sm:$0xf] %v270
    // Predicated region
    $region10: #{tpu_custom_call.1} parent=1 // pred_check
      _
    $region11: #{tpu_custom_call.1} parent=1 // pred_check_branch
      %304 = sbr.rel (0) target = $region13
    $region12: #{tpu_custom_call.1} parent=1 // pred_region
      %s306 = ssub.s32 1024, 1024
      %307 = vsyncadd [#allocation3], %s306
      %s308 = sshll.u32 [#allocation2], 4
      %s309 = int_to_ptr.vmem [resolvable:$true] %s308
      %314 = dma.vmem_to_hbm [thread:$0]  %s309, 1024, %s2, [#allocation3], 64, 64, 4
    $region13: #{tpu_custom_call.1} parent=1 // pred_fallthru
      _
    // Predicated region
    $region14: #{tpu_custom_call.1} parent=1 // pred_check
      _
    $region15: #{tpu_custom_call.1} parent=1 // pred_check_branch
      %316 = sbr.rel (0) target = $region17
    $region16: #{tpu_custom_call.1} parent=1 // pred_region
      %317 = dma.done [#allocation3], 1024
    $region17: #{tpu_custom_call.1} parent=1 // pred_fallthru
      _
    %318 = vsyncpa [#allocation3], 1

</llo_original>
